<compile_context>
chip_gen: v7x
topology: tpu7x:2x2x1
jax: 0.10.0
libtpu: 0.0.40
codegen_flags: <defaults>
</compile_context>

<pallas_src>
import math

import jax
import jax.numpy as jnp
from jax.experimental import pallas as pl
from jax.experimental.pallas import tpu as pltpu

BN_EPS = 1e-5


# ------------------------------ Pallas kernel -------------------------------

def _fused_conv_bn_relu_kernel(xt_ref, w_ref, gamma_ref, beta_ref, o_ref):
    # (Cout, K) @ (K, M) on the MXU; bf16 inputs, f32 accumulation.
    y = jnp.dot(w_ref[...], xt_ref[...], preferred_element_type=jnp.float32)
    # BatchNorm training-mode batch stats per output channel (= per row), biased
    # variance, then affine + ReLU — all fused before the single lane-dense store.
    mean = jnp.mean(y, axis=1, keepdims=True)
    d = y - mean
    var = jnp.mean(d * d, axis=1, keepdims=True)
    scale = gamma_ref[...] * jax.lax.rsqrt(var + BN_EPS)
    o_ref[...] = jnp.maximum(d * scale + beta_ref[...], 0.0)


# ------------------------------ conv wrapper --------------------------------

def conv_bn_relu(x_cnhw, w_flat, gamma, beta, *, kh, kw, stride, padding):
    """Fused Conv(bias=False) -> BatchNorm(batch stats) -> ReLU.

    x_cnhw : (Cin, N, H, W) f32 activations (channel-major internal layout)
    w_flat : (Cout, Cin*kh*kw) f32 weights (row = output channel)
    returns: (Cout, N, Ho, Wo) f32
    """
    Cin, N, H, W = x_cnhw.shape
    ph, pw = padding
    sh, sw = stride
    Ho = (H + 2 * ph - kh) // sh + 1
    Wo = (W + 2 * pw - kw) // sw + 1
    M = N * Ho * Wo
    K = Cin * kh * kw
    Cout = w_flat.shape[0]

    # TODO(synk): for realistic N/H/W/C, replace this HBM-materialized im2col with a
    # K-axis tap accumulation inside the kernel to keep HBM traffic at 1x.
    xp = jnp.pad(x_cnhw, ((0, 0), (0, 0), (ph, ph), (pw, pw)))
    taps = []
    for i in range(kh):
        for j in range(kw):
            taps.append(xp[:, :, i:i + sh * (Ho - 1) + 1:sh,
                            j:j + sw * (Wo - 1) + 1:sw])
    # Row order = (cin, tap), matching (Cout, Cin, kh, kw).reshape(Cout, -1).
    xt = jnp.stack(taps, axis=1).reshape(K, M)

    y_t = pl.pallas_call(
        _fused_conv_bn_relu_kernel,
        out_shape=jax.ShapeDtypeStruct((Cout, M), jnp.float32),
        grid=(1,),  # whole problem fits VMEM; single step avoids per-step overhead
        in_specs=[
            pl.BlockSpec((K, M), lambda i: (0, 0)),
            pl.BlockSpec((Cout, K), lambda i: (0, 0)),
            pl.BlockSpec((Cout, 1), lambda i: (0, 0)),
            pl.BlockSpec((Cout, 1), lambda i: (0, 0)),
        ],
        out_specs=pl.BlockSpec((Cout, M), lambda i: (0, 0)),
        compiler_params=pltpu.CompilerParams(
            dimension_semantics=("arbitrary",)),
    )(
        xt.astype(jnp.bfloat16),            # bf16: native MXU dtype, half the DMA bytes
        w_flat.astype(jnp.bfloat16),
        gamma.reshape(Cout, 1).astype(jnp.float32),
        beta.reshape(Cout, 1).astype(jnp.float32),
    )
    return y_t.reshape(Cout, N, Ho, Wo)


def _fused_block_weight(w1, w3):
    """Embed the 1x1 branch (pad 0) into the center tap of a combined 3x3 weight so
    both branches + the channel concat become ONE matmul. Output-channel order is
    [1x1 channels, 3x3 channels], identical to torch.cat(dim=1)."""
    ch1, cin = w1.shape[0], w1.shape[1]
    w1_as_3x3 = jnp.zeros((ch1, cin, 3, 3), w1.dtype).at[:, :, 1, 1].set(w1[:, :, 0, 0])
    wcomb = jnp.concatenate([w1_as_3x3, w3], axis=0)       # (ch1+ch3, Cin, 3, 3)
    return wcomb.reshape(wcomb.shape[0], -1)


# --------------------------- SmallInceptionStage ----------------------------

def init_stage_params(key, input_shape, mb_channels, downsample_channels):
    """Deterministic parameter init mirroring SmallInceptionStage.__init__ shapes."""
    params = {"blocks": [], "downsample": None}
    cin = input_shape[0]
    for (ch1, ch3) in mb_channels:
        key, k1, k3 = jax.random.split(key, 3)
        blk = {
            "w1": jax.random.normal(k1, (ch1, cin, 1, 1), jnp.float32) / math.sqrt(cin),
            "g1": jnp.ones((ch1,), jnp.float32),
            "b1": jnp.zeros((ch1,), jnp.float32),
            "w3": jax.random.normal(k3, (ch3, cin, 3, 3), jnp.float32) / math.sqrt(9 * cin),
            "g3": jnp.ones((ch3,), jnp.float32),
            "b3": jnp.zeros((ch3,), jnp.float32),
        }
        params["blocks"].append(blk)
        cin = ch1 + ch3
    if downsample_channels > 0:
        key, kd = jax.random.split(key)
        params["downsample"] = {
            "w": jax.random.normal(kd, (downsample_channels, cin, 3, 3), jnp.float32)
                 / math.sqrt(9 * cin),
            "g": jnp.ones((downsample_channels,), jnp.float32),
            "b": jnp.zeros((downsample_channels,), jnp.float32),
        }
    return params


def small_inception_stage_forward(x_nchw, params, with_residual=False):
    """Forward pass of SmallInceptionStage. Input/output are NCHW (PyTorch layout).

    Padding follows the reference module exactly: stride-1 1x1 -> pad 0, stride-1
    3x3 -> pad 1 (both reproduced by the fused 3x3 conv with pad 1), stride-2
    downsample 3x3 -> pad (1, 1)."""
    x = jnp.transpose(x_nchw.astype(jnp.float32), (1, 0, 2, 3))  # NCHW -> CNHW
    inputs = x
    for blk in params["blocks"]:
        wcomb = _fused_block_weight(blk["w1"], blk["w3"])
        gcomb = jnp.concatenate([blk["g1"], blk["g3"]])
        bcomb = jnp.concatenate([blk["b1"], blk["b3"]])
        x = conv_bn_relu(x, wcomb, gcomb, bcomb,
                         kh=3, kw=3, stride=(1, 1), padding=(1, 1))
    if with_residual:
        x = x + inputs
    if params["downsample"] is not None:
        d = params["downsample"]
        x = conv_bn_relu(x, d["w"].reshape(d["w"].shape[0], -1), d["g"], d["b"],
                         kh=3, kw=3, stride=(2, 2), padding=(1, 1))
    return jnp.transpose(x, (1, 0, 2, 3))  # CNHW -> NCHW


# ----------------------------------- main -----------------------------------

if __name__ == "__main__":
    key = jax.random.PRNGKey(0)
    key, kx, kp = jax.random.split(key, 3)

    # Module config: input_shape=(C=4, H=16, W=16), two multi-branch blocks, downsample.
    input_shape = (4, 16, 16)
    mb_channels = [(8, 8), (8, 8)]
    downsample_channels = 16
    batch = 2

    x = jax.random.normal(kx, (batch, *input_shape), jnp.float32)  # NCHW
    params = init_stage_params(kp, input_shape, mb_channels, downsample_channels)

    fwd = jax.jit(lambda xx: small_inception_stage_forward(
        xx, params, with_residual=False))
    out = fwd(x)
    jax.block_until_ready(out)

    # Expected: channels=downsample_channels, spatial halved by the stride-2 3x3 conv.
    assert out.shape == (batch, downsample_channels, 8, 8), out.shape
    assert bool(jnp.all(jnp.isfinite(out)))
    print("KERNEL_OK")
</pallas_src>

<mosaic_0001>
module attributes {stable_mosaic.version = 11 : i64} {
  func.func @_fused_conv_bn_relu_kernel(%arg0: i32, %arg1: memref<36x512xbf16, #tpu.memory_space<vmem>>, %arg2: memref<16x36xbf16, #tpu.memory_space<vmem>>, %arg3: memref<16x1xf32, #tpu.memory_space<vmem>>, %arg4: memref<16x1xf32, #tpu.memory_space<vmem>>, %arg5: memref<16x512xf32, #tpu.memory_space<vmem>>) attributes {dimension_semantics = [#tpu.dimension_semantics<arbitrary>], iteration_bounds = array<i64: 1>, scalar_prefetch = 0 : i64, scratch_operands = 0 : i64, tpu.core_type = #tpu.core_type<tc>, window_params = [{pipeline_mode = #tpu.pipeline_mode<synchronous>, transform_indices = @transform_0, window_bounds = array<i64: 36, 512>}, {pipeline_mode = #tpu.pipeline_mode<synchronous>, transform_indices = @transform_1, window_bounds = array<i64: 16, 36>}, {pipeline_mode = #tpu.pipeline_mode<synchronous>, transform_indices = @transform_2, window_bounds = array<i64: 16, 1>}, {pipeline_mode = #tpu.pipeline_mode<synchronous>, transform_indices = @transform_3, window_bounds = array<i64: 16, 1>}, {pipeline_mode = #tpu.pipeline_mode<synchronous>, transform_indices = @transform_4, window_bounds = array<i64: 16, 512>}]} {
    %c0 = arith.constant 0 : index
    %c0_0 = arith.constant 0 : index
    %0 = vector.load %arg2[%c0, %c0_0] : memref<16x36xbf16, #tpu.memory_space<vmem>>, vector<16x36xbf16>
    %c0_1 = arith.constant 0 : index
    %c0_2 = arith.constant 0 : index
    %1 = vector.load %arg1[%c0_1, %c0_2] : memref<36x512xbf16, #tpu.memory_space<vmem>>, vector<36x512xbf16>
    %cst = arith.constant dense<0.000000e+00> : vector<16x512xf32>
    %2 = tpu.matmul %0, %1, %cst {dimension_numbers = #tpu.dot_dimension_numbers<[1], [0], [0], [1], [0, 0, 1, 1], [], []>} : vector<16x36xbf16>, vector<36x512xbf16>, vector<16x512xf32> -> vector<16x512xf32>
    %cst_3 = arith.constant dense<0.000000e+00> : vector<16xf32>
    %3 = vector.multi_reduction <add>, %2, %cst_3 [1] : vector<16x512xf32> to vector<16xf32>
    %4 = vector.shape_cast %3 : vector<16xf32> to vector<16x1xf32>
    %cst_4 = arith.constant 5.120000e+02 : f32
    %5 = vector.broadcast %cst_4 : f32 to vector<16x1xf32>
    %6 = arith.divf %4, %5 : vector<16x1xf32>
    %7 = vector.broadcast %6 : vector<16x1xf32> to vector<16x512xf32>
    %8 = arith.subf %2, %7 : vector<16x512xf32>
    %9 = arith.mulf %8, %8 : vector<16x512xf32>
    %cst_5 = arith.constant dense<0.000000e+00> : vector<16xf32>
    %10 = vector.multi_reduction <add>, %9, %cst_5 [1] : vector<16x512xf32> to vector<16xf32>
    %11 = vector.shape_cast %10 : vector<16xf32> to vector<16x1xf32>
    %cst_6 = arith.constant 5.120000e+02 : f32
    %12 = vector.broadcast %cst_6 : f32 to vector<16x1xf32>
    %13 = arith.divf %11, %12 : vector<16x1xf32>
    %c0_7 = arith.constant 0 : index
    %c0_8 = arith.constant 0 : index
    %14 = vector.load %arg3[%c0_7, %c0_8] : memref<16x1xf32, #tpu.memory_space<vmem>>, vector<16x1xf32>
    %cst_9 = arith.constant 9.99999974E-6 : f32
    %15 = vector.broadcast %cst_9 : f32 to vector<16x1xf32>
    %16 = arith.addf %13, %15 : vector<16x1xf32>
    %17 = math.rsqrt %16 : vector<16x1xf32>
    %18 = arith.mulf %14, %17 : vector<16x1xf32>
    %19 = vector.broadcast %18 : vector<16x1xf32> to vector<16x512xf32>
    %20 = arith.mulf %8, %19 : vector<16x512xf32>
    %c0_10 = arith.constant 0 : index
    %c0_11 = arith.constant 0 : index
    %21 = vector.load %arg4[%c0_10, %c0_11] : memref<16x1xf32, #tpu.memory_space<vmem>>, vector<16x1xf32>
    %22 = vector.broadcast %21 : vector<16x1xf32> to vector<16x512xf32>
    %23 = arith.addf %20, %22 : vector<16x512xf32>
    %cst_12 = arith.constant 0.000000e+00 : f32
    %24 = vector.broadcast %cst_12 : f32 to vector<16x512xf32>
    %25 = arith.maximumf %23, %24 : vector<16x512xf32>
    %c0_13 = arith.constant 0 : index
    %c0_14 = arith.constant 0 : index
    %26 = vector.load %arg5[%c0_13, %c0_14] : memref<16x512xf32, #tpu.memory_space<vmem>>, vector<16x512xf32>
    tpu.vector_store %arg5[%c0_13, %c0_14], %25 {strides = array<i32>} : memref<16x512xf32, #tpu.memory_space<vmem>>, vector<16x512xf32>,
    return
  }
  func.func @transform_0(%arg0: i32) -> (i32, i32) {
    %c0_i32 = arith.constant 0 : i32
    %c0_i32_0 = arith.constant 0 : i32
    %c0_i32_1 = arith.constant 0 : i32
    return %c0_i32, %c0_i32_0 : i32, i32
  }
  func.func @transform_1(%arg0: i32) -> (i32, i32) {
    %c0_i32 = arith.constant 0 : i32
    %c0_i32_0 = arith.constant 0 : i32
    %c0_i32_1 = arith.constant 0 : i32
    return %c0_i32, %c0_i32_0 : i32, i32
  }
  func.func @transform_2(%arg0: i32) -> (i32, i32) {
    %c0_i32 = arith.constant 0 : i32
    %c0_i32_0 = arith.constant 0 : i32
    %c0_i32_1 = arith.constant 0 : i32
    return %c0_i32, %c0_i32_0 : i32, i32
  }
  func.func @transform_3(%arg0: i32) -> (i32, i32) {
    %c0_i32 = arith.constant 0 : i32
    %c0_i32_0 = arith.constant 0 : i32
    %c0_i32_1 = arith.constant 0 : i32
    return %c0_i32, %c0_i32_0 : i32, i32
  }
  func.func @transform_4(%arg0: i32) -> (i32, i32) {
    %c0_i32 = arith.constant 0 : i32
    %c0_i32_0 = arith.constant 0 : i32
    %c0_i32_1 = arith.constant 0 : i32
    return %c0_i32, %c0_i32_0 : i32, i32
  }
}

module attributes {stable_mosaic.version = 11 : i64} {
  func.func @_fused_conv_bn_relu_kernel(%arg0: i32, %arg1: memref<144x512xbf16, #tpu.memory_space<vmem>>, %arg2: memref<16x144xbf16, #tpu.memory_space<vmem>>, %arg3: memref<16x1xf32, #tpu.memory_space<vmem>>, %arg4: memref<16x1xf32, #tpu.memory_space<vmem>>, %arg5: memref<16x512xf32, #tpu.memory_space<vmem>>) attributes {dimension_semantics = [#tpu.dimension_semantics<arbitrary>], iteration_bounds = array<i64: 1>, scalar_prefetch = 0 : i64, scratch_operands = 0 : i64, tpu.core_type = #tpu.core_type<tc>, window_params = [{pipeline_mode = #tpu.pipeline_mode<synchronous>, transform_indices = @transform_0, window_bounds = array<i64: 144, 512>}, {pipeline_mode = #tpu.pipeline_mode<synchronous>, transform_indices = @transform_1, window_bounds = array<i64: 16, 144>}, {pipeline_mode = #tpu.pipeline_mode<synchronous>, transform_indices = @transform_2, window_bounds = array<i64: 16, 1>}, {pipeline_mode = #tpu.pipeline_mode<synchronous>, transform_indices = @transform_3, window_bounds = array<i64: 16, 1>}, {pipeline_mode = #tpu.pipeline_mode<synchronous>, transform_indices = @transform_4, window_bounds = array<i64: 16, 512>}]} {
    %c0 = arith.constant 0 : index
    %c0_0 = arith.constant 0 : index
    %0 = vector.load %arg2[%c0, %c0_0] : memref<16x144xbf16, #tpu.memory_space<vmem>>, vector<16x144xbf16>
    %c0_1 = arith.constant 0 : index
    %c0_2 = arith.constant 0 : index
    %1 = vector.load %arg1[%c0_1, %c0_2] : memref<144x512xbf16, #tpu.memory_space<vmem>>, vector<144x512xbf16>
    %cst = arith.constant dense<0.000000e+00> : vector<16x512xf32>
    %2 = tpu.matmul %0, %1, %cst {dimension_numbers = #tpu.dot_dimension_numbers<[1], [0], [0], [1], [0, 0, 1, 1], [], []>} : vector<16x144xbf16>, vector<144x512xbf16>, vector<16x512xf32> -> vector<16x512xf32>
    %cst_3 = arith.constant dense<0.000000e+00> : vector<16xf32>
    %3 = vector.multi_reduction <add>, %2, %cst_3 [1] : vector<16x512xf32> to vector<16xf32>
    %4 = vector.shape_cast %3 : vector<16xf32> to vector<16x1xf32>
    %cst_4 = arith.constant 5.120000e+02 : f32
    %5 = vector.broadcast %cst_4 : f32 to vector<16x1xf32>
    %6 = arith.divf %4, %5 : vector<16x1xf32>
    %7 = vector.broadcast %6 : vector<16x1xf32> to vector<16x512xf32>
    %8 = arith.subf %2, %7 : vector<16x512xf32>
    %9 = arith.mulf %8, %8 : vector<16x512xf32>
    %cst_5 = arith.constant dense<0.000000e+00> : vector<16xf32>
    %10 = vector.multi_reduction <add>, %9, %cst_5 [1] : vector<16x512xf32> to vector<16xf32>
    %11 = vector.shape_cast %10 : vector<16xf32> to vector<16x1xf32>
    %cst_6 = arith.constant 5.120000e+02 : f32
    %12 = vector.broadcast %cst_6 : f32 to vector<16x1xf32>
    %13 = arith.divf %11, %12 : vector<16x1xf32>
    %c0_7 = arith.constant 0 : index
    %c0_8 = arith.constant 0 : index
    %14 = vector.load %arg3[%c0_7, %c0_8] : memref<16x1xf32, #tpu.memory_space<vmem>>, vector<16x1xf32>
    %cst_9 = arith.constant 9.99999974E-6 : f32
    %15 = vector.broadcast %cst_9 : f32 to vector<16x1xf32>
    %16 = arith.addf %13, %15 : vector<16x1xf32>
    %17 = math.rsqrt %16 : vector<16x1xf32>
    %18 = arith.mulf %14, %17 : vector<16x1xf32>
    %19 = vector.broadcast %18 : vector<16x1xf32> to vector<16x512xf32>
    %20 = arith.mulf %8, %19 : vector<16x512xf32>
    %c0_10 = arith.constant 0 : index
    %c0_11 = arith.constant 0 : index
    %21 = vector.load %arg4[%c0_10, %c0_11] : memref<16x1xf32, #tpu.memory_space<vmem>>, vector<16x1xf32>
    %22 = vector.broadcast %21 : vector<16x1xf32> to vector<16x512xf32>
    %23 = arith.addf %20, %22 : vector<16x512xf32>
    %cst_12 = arith.constant 0.000000e+00 : f32
    %24 = vector.broadcast %cst_12 : f32 to vector<16x512xf32>
    %25 = arith.maximumf %23, %24 : vector<16x512xf32>
    %c0_13 = arith.constant 0 : index
    %c0_14 = arith.constant 0 : index
    %26 = vector.load %arg5[%c0_13, %c0_14] : memref<16x512xf32, #tpu.memory_space<vmem>>, vector<16x512xf32>
    tpu.vector_store %arg5[%c0_13, %c0_14], %25 {strides = array<i32>} : memref<16x512xf32, #tpu.memory_space<vmem>>, vector<16x512xf32>,
    return
  }
  func.func @transform_0(%arg0: i32) -> (i32, i32) {
    %c0_i32 = arith.constant 0 : i32
    %c0_i32_0 = arith.constant 0 : i32
    %c0_i32_1 = arith.constant 0 : i32
    return %c0_i32, %c0_i32_0 : i32, i32
  }
  func.func @transform_1(%arg0: i32) -> (i32, i32) {
    %c0_i32 = arith.constant 0 : i32
    %c0_i32_0 = arith.constant 0 : i32
    %c0_i32_1 = arith.constant 0 : i32
    return %c0_i32, %c0_i32_0 : i32, i32
  }
  func.func @transform_2(%arg0: i32) -> (i32, i32) {
    %c0_i32 = arith.constant 0 : i32
    %c0_i32_0 = arith.constant 0 : i32
    %c0_i32_1 = arith.constant 0 : i32
    return %c0_i32, %c0_i32_0 : i32, i32
  }
  func.func @transform_3(%arg0: i32) -> (i32, i32) {
    %c0_i32 = arith.constant 0 : i32
    %c0_i32_0 = arith.constant 0 : i32
    %c0_i32_1 = arith.constant 0 : i32
    return %c0_i32, %c0_i32_0 : i32, i32
  }
  func.func @transform_4(%arg0: i32) -> (i32, i32) {
    %c0_i32 = arith.constant 0 : i32
    %c0_i32_0 = arith.constant 0 : i32
    %c0_i32_1 = arith.constant 0 : i32
    return %c0_i32, %c0_i32_0 : i32, i32
  }
}

module attributes {stable_mosaic.version = 11 : i64} {
  func.func @_fused_conv_bn_relu_kernel(%arg0: i32, %arg1: memref<144x128xbf16, #tpu.memory_space<vmem>>, %arg2: memref<16x144xbf16, #tpu.memory_space<vmem>>, %arg3: memref<16x1xf32, #tpu.memory_space<vmem>>, %arg4: memref<16x1xf32, #tpu.memory_space<vmem>>, %arg5: memref<16x128xf32, #tpu.memory_space<vmem>>) attributes {dimension_semantics = [#tpu.dimension_semantics<arbitrary>], iteration_bounds = array<i64: 1>, scalar_prefetch = 0 : i64, scratch_operands = 0 : i64, tpu.core_type = #tpu.core_type<tc>, window_params = [{pipeline_mode = #tpu.pipeline_mode<synchronous>, transform_indices = @transform_0, window_bounds = array<i64: 144, 128>}, {pipeline_mode = #tpu.pipeline_mode<synchronous>, transform_indices = @transform_1, window_bounds = array<i64: 16, 144>}, {pipeline_mode = #tpu.pipeline_mode<synchronous>, transform_indices = @transform_2, window_bounds = array<i64: 16, 1>}, {pipeline_mode = #tpu.pipeline_mode<synchronous>, transform_indices = @transform_3, window_bounds = array<i64: 16, 1>}, {pipeline_mode = #tpu.pipeline_mode<synchronous>, transform_indices = @transform_4, window_bounds = array<i64: 16, 128>}]} {
    %c0 = arith.constant 0 : index
    %c0_0 = arith.constant 0 : index
    %0 = vector.load %arg2[%c0, %c0_0] : memref<16x144xbf16, #tpu.memory_space<vmem>>, vector<16x144xbf16>
    %c0_1 = arith.constant 0 : index
    %c0_2 = arith.constant 0 : index
    %1 = vector.load %arg1[%c0_1, %c0_2] : memref<144x128xbf16, #tpu.memory_space<vmem>>, vector<144x128xbf16>
    %cst = arith.constant dense<0.000000e+00> : vector<16x128xf32>
    %2 = tpu.matmul %0, %1, %cst {dimension_numbers = #tpu.dot_dimension_numbers<[1], [0], [0], [1], [0, 0, 1, 1], [], []>} : vector<16x144xbf16>, vector<144x128xbf16>, vector<16x128xf32> -> vector<16x128xf32>
    %cst_3 = arith.constant dense<0.000000e+00> : vector<16xf32>
    %3 = vector.multi_reduction <add>, %2, %cst_3 [1] : vector<16x128xf32> to vector<16xf32>
    %4 = vector.shape_cast %3 : vector<16xf32> to vector<16x1xf32>
    %cst_4 = arith.constant 1.280000e+02 : f32
    %5 = vector.broadcast %cst_4 : f32 to vector<16x1xf32>
    %6 = arith.divf %4, %5 : vector<16x1xf32>
    %7 = vector.broadcast %6 : vector<16x1xf32> to vector<16x128xf32>
    %8 = arith.subf %2, %7 : vector<16x128xf32>
    %9 = arith.mulf %8, %8 : vector<16x128xf32>
    %cst_5 = arith.constant dense<0.000000e+00> : vector<16xf32>
    %10 = vector.multi_reduction <add>, %9, %cst_5 [1] : vector<16x128xf32> to vector<16xf32>
    %11 = vector.shape_cast %10 : vector<16xf32> to vector<16x1xf32>
    %cst_6 = arith.constant 1.280000e+02 : f32
    %12 = vector.broadcast %cst_6 : f32 to vector<16x1xf32>
    %13 = arith.divf %11, %12 : vector<16x1xf32>
    %c0_7 = arith.constant 0 : index
    %c0_8 = arith.constant 0 : index
    %14 = vector.load %arg3[%c0_7, %c0_8] : memref<16x1xf32, #tpu.memory_space<vmem>>, vector<16x1xf32>
    %cst_9 = arith.constant 9.99999974E-6 : f32
    %15 = vector.broadcast %cst_9 : f32 to vector<16x1xf32>
    %16 = arith.addf %13, %15 : vector<16x1xf32>
    %17 = math.rsqrt %16 : vector<16x1xf32>
    %18 = arith.mulf %14, %17 : vector<16x1xf32>
    %19 = vector.broadcast %18 : vector<16x1xf32> to vector<16x128xf32>
    %20 = arith.mulf %8, %19 : vector<16x128xf32>
    %c0_10 = arith.constant 0 : index
    %c0_11 = arith.constant 0 : index
    %21 = vector.load %arg4[%c0_10, %c0_11] : memref<16x1xf32, #tpu.memory_space<vmem>>, vector<16x1xf32>
    %22 = vector.broadcast %21 : vector<16x1xf32> to vector<16x128xf32>
    %23 = arith.addf %20, %22 : vector<16x128xf32>
    %cst_12 = arith.constant 0.000000e+00 : f32
    %24 = vector.broadcast %cst_12 : f32 to vector<16x128xf32>
    %25 = arith.maximumf %23, %24 : vector<16x128xf32>
    %c0_13 = arith.constant 0 : index
    %c0_14 = arith.constant 0 : index
    %26 = vector.load %arg5[%c0_13, %c0_14] : memref<16x128xf32, #tpu.memory_space<vmem>>, vector<16x128xf32>
    tpu.vector_store %arg5[%c0_13, %c0_14], %25 {strides = array<i32>} : memref<16x128xf32, #tpu.memory_space<vmem>>, vector<16x128xf32>,
    return
  }
  func.func @transform_0(%arg0: i32) -> (i32, i32) {
    %c0_i32 = arith.constant 0 : i32
    %c0_i32_0 = arith.constant 0 : i32
    %c0_i32_1 = arith.constant 0 : i32
    return %c0_i32, %c0_i32_0 : i32, i32
  }
  func.func @transform_1(%arg0: i32) -> (i32, i32) {
    %c0_i32 = arith.constant 0 : i32
    %c0_i32_0 = arith.constant 0 : i32
    %c0_i32_1 = arith.constant 0 : i32
    return %c0_i32, %c0_i32_0 : i32, i32
  }
  func.func @transform_2(%arg0: i32) -> (i32, i32) {
    %c0_i32 = arith.constant 0 : i32
    %c0_i32_0 = arith.constant 0 : i32
    %c0_i32_1 = arith.constant 0 : i32
    return %c0_i32, %c0_i32_0 : i32, i32
  }
  func.func @transform_3(%arg0: i32) -> (i32, i32) {
    %c0_i32 = arith.constant 0 : i32
    %c0_i32_0 = arith.constant 0 : i32
    %c0_i32_1 = arith.constant 0 : i32
    return %c0_i32, %c0_i32_0 : i32, i32
  }
  func.func @transform_4(%arg0: i32) -> (i32, i32) {
    %c0_i32 = arith.constant 0 : i32
    %c0_i32_0 = arith.constant 0 : i32
    %c0_i32_1 = arith.constant 0 : i32
    return %c0_i32, %c0_i32_0 : i32, i32
  }
}

</mosaic_0001>

<llo_original>
// kernel: _lambda_.3
$region0: #{_lambda_.3}
  #allocation0 [shape = 'u32[]', space=smem, size = 0x4, offset = 0x4, fixed_abs, tag = 'smem constant byte address 0x4 - core index']
  #allocation1 [shape = 'u32[144,128]{1,0:T(1,128)}', space=vmem, size = 0x12000, scoped, tag = 'internal scratch']
  %s0 = inlined_call_operand.vmem [shape: bf16[36,512], index: 0, kind: input, shape index: {}]
  %s1 = inlined_call_operand.vmem [shape: bf16[16,36], index: 1, kind: input, shape index: {}]
  %s2 = inlined_call_operand.vmem [shape: f32[16,1], index: 2, kind: input, shape index: {}]
  %s3 = inlined_call_operand.vmem [shape: f32[16,1], index: 3, kind: input, shape index: {}]
  %s4 = inlined_call_operand.vmem [shape: f32[16,512], index: 4, kind: output, shape index: {}]
  %s5 = sld [smem:[#allocation0]]
  $region26: #{_lambda_.3} parent=0
    _
  %s7 = ssub.s32 1, %s5
  %s8 = scalar_select 0, %s7, %s5
  // Predicated region
  $region2: #{_lambda_.3} parent=0 // pred_check
    _
  $region3: #{_lambda_.3} parent=0 // pred_check_branch
    %10 = sbr.rel (0) target = $region5
  $region4: #{_lambda_.3} parent=0 // pred_region
    _
  $region5: #{_lambda_.3} parent=0 // pred_fallthru
    _
  // Predicated region
  $region6: #{_lambda_.3} parent=0 // pred_check
    _
  $region7: #{_lambda_.3} parent=0 // pred_check_branch
    %12 = sbr.rel (0) target = $region9
  $region8: #{_lambda_.3} parent=0 // pred_region
    _
  $region9: #{_lambda_.3} parent=0 // pred_fallthru
    _
  // Predicated region
  $region10: #{_lambda_.3} parent=0 // pred_check
    _
  $region11: #{_lambda_.3} parent=0 // pred_check_branch
    %14 = sbr.rel (0) target = $region13
  $region12: #{_lambda_.3} parent=0 // pred_region
    _
  $region13: #{_lambda_.3} parent=0 // pred_fallthru
    _
  // Predicated region
  $region14: #{_lambda_.3} parent=0 // pred_check
    _
  $region15: #{_lambda_.3} parent=0 // pred_check_branch
    %16 = sbr.rel (0) target = $region17
  $region16: #{_lambda_.3} parent=0 // pred_region
    _
  $region17: #{_lambda_.3} parent=0 // pred_fallthru
    _
  %v18 = vld [vmem:[%s1] sm:$0xf]
  %v19 = vld [vmem:[%s1 + $0x4] sm:$0xf]
  %v20 = vld [vmem:[%s0] sm:$0xff]
  %v21 = vld [vmem:[%s0 + $0x8] sm:$0xff]
  %v22 = vld [vmem:[%s0 + $0x10] sm:$0xff]
  %v23 = vld [vmem:[%s0 + $0x18] sm:$0xff]
  %v24 = vld [vmem:[%s0 + $0x20] sm:$0xff]
  %v25 = vld [vmem:[%s0 + $0x28] sm:$0xff]
  %v26 = vld [vmem:[%s0 + $0x30] sm:$0xff]
  %v27 = vld [vmem:[%s0 + $0x38] sm:$0xff]
  %v28 = vld [vmem:[%s0 + $0x40] sm:$0x33]
  %v29 = vld [vmem:[%s0 + $0x48] sm:$0x33]
  %v32 = vunpack.c.l.b16 %v18
  %v33 = vunpack.c.l.b16 %v19
  %v34 = vpack.c.b16 %v33, %v32
  %v45 = vunpack.c.l.b16 %v20
  %v46 = vunpack.c.h.b16 %v20
  %v47 = vunpack.c.l.b16 %v21
  %v48 = vunpack.c.h.b16 %v21
  %v49 = vunpack.c.l.b16 %v22
  %v50 = vunpack.c.h.b16 %v22
  %v51 = vunpack.c.l.b16 %v23
  %v52 = vunpack.c.h.b16 %v23
  %v53 = vunpack.c.l.b16 %v24
  %v54 = vunpack.c.h.b16 %v24
  %v55 = vunpack.c.l.b16 %v25
  %v56 = vunpack.c.h.b16 %v25
  %v57 = vunpack.c.l.b16 %v26
  %v58 = vunpack.c.h.b16 %v26
  %v59 = vunpack.c.l.b16 %v27
  %v60 = vunpack.c.h.b16 %v27
  %v61 = vunpack.c.l.b16 %v28
  %v62 = vunpack.c.h.b16 %v28
  %v63 = vunpack.c.l.b16 %v29
  %v64 = vunpack.c.h.b16 %v29
  %v65 = vpack.c.b16 %v49, %v45
  %v66 = vpack.c.b16 %v50, %v46
  %v67 = vpack.c.b16 %v51, %v47
  %v68 = vpack.c.b16 %v52, %v48
  %v69 = vpack.c.b16 %v57, %v53
  %v70 = vpack.c.b16 %v58, %v54
  %v71 = vpack.c.b16 %v59, %v55
  %v72 = vpack.c.b16 %v60, %v56
  %v73 = vpack.c.b16 %v61, %v61
  %v74 = vpack.c.b16 %v62, %v62
  %v75 = vpack.c.b16 %v63, %v63
  %v76 = vpack.c.b16 %v64, %v64
  %vm85 = vcmask 293888
  %v87 = vsel %vm85, %v34, 0
  %vm89 = vcmask 1041408
  %v91 = vsel %vm89, %v73, 0
  %v94 = vsel %vm89, %v74, 0
  %v97 = vsel %vm89, %v75, 0
  %v100 = vsel %vm89, %v76, 0
  %102 = vmatprep.subr.bf16.mxu0 %v66
  %103 = vmatpush1.bf16.msra.mxu0 %v65
  %104 = vmatprep.subr.bf16.mxu0 %v70
  %105 = vmatpush1.bf16.msra.mxu0 %v69
  %106 = vmatprep.subr.bf16.mxu0 %v94
  %107 = vmatpush1.bf16.msra.mxu0 %v91
  %108 = vmatprep.subr.bf16.mxu0 0
  %109 = vmatpush1.bf16.msra.mxu0 0
  %110 = vmatprep.subr.bf16.mxu0 0
  %111 = vmatpush1.bf16.msra.mxu0 0
  %112 = vmatprep.subr.bf16.mxu0 0
  %113 = vmatpush1.bf16.msra.mxu0 0
  %114 = vmatprep.subr.bf16.mxu0 0
  %115 = vmatpush1.bf16.msra.mxu0 0
  %116 = vmatprep.subr.bf16.mxu0 0
  %117 = vmatpush1.bf16.msra.mxu0 0
  %118 = vmatprep.subr.bf16.mxu0 0
  %119 = vmatpush1.bf16.msra.mxu0 0
  %120 = vmatprep.subr.bf16.mxu0 0
  %121 = vmatpush1.bf16.msra.mxu0 0
  %122 = vmatprep.subr.bf16.mxu0 0
  %123 = vmatpush1.bf16.msra.mxu0 0
  %124 = vmatprep.subr.bf16.mxu0 0
  %125 = vmatpush1.bf16.msra.mxu0 0
  %126 = vmatprep.subr.bf16.mxu0 0
  %127 = vmatpush1.bf16.msra.mxu0 0
  %128 = vmatprep.subr.bf16.mxu0 0
  %129 = vmatpush1.bf16.msra.mxu0 0
  %130 = vmatprep.subr.bf16.mxu0 0
  %131 = vmatpush1.bf16.msra.mxu0 0
  %132 = vmatprep.subr.bf16.mxu0 0
  %133 = vmatpush1.bf16.msra.mxu0 0
  %134 = vmatprep.mubr.bf16.mxu0 0
  %135 = vmatmul.mubr.bf16.gmra.mrb[0].mxu0 %v87
  %v136 = vpop.f32.mrb[0].mxu0
  %v137 = vadd.f32 0.0, %v136
  %v138 = vpop.f32.mrb[0].mxu0
  %v139 = vadd.f32 0.0, %v138
  %v140 = vpop.f32.mrb[0].mxu0
  %v141 = vadd.f32 0.0, %v140
  %v142 = vpop.f32.mrb[0].mxu0
  %v143 = vadd.f32 0.0, %v142
  %144 = vdwg.mxu0
  %145 = vmatprep.subr.bf16.mxu0 %v68
  %146 = vmatpush1.bf16.msra.mxu0 %v67
  %147 = vmatprep.subr.bf16.mxu0 %v72
  %148 = vmatpush1.bf16.msra.mxu0 %v71
  %149 = vmatprep.subr.bf16.mxu0 %v100
  %150 = vmatpush1.bf16.msra.mxu0 %v97
  %151 = vmatprep.subr.bf16.mxu0 0
  %152 = vmatpush1.bf16.msra.mxu0 0
  %153 = vmatprep.subr.bf16.mxu0 0
  %154 = vmatpush1.bf16.msra.mxu0 0
  %155 = vmatprep.subr.bf16.mxu0 0
  %156 = vmatpush1.bf16.msra.mxu0 0
  %157 = vmatprep.subr.bf16.mxu0 0
  %158 = vmatpush1.bf16.msra.mxu0 0
  %159 = vmatprep.subr.bf16.mxu0 0
  %160 = vmatpush1.bf16.msra.mxu0 0
  %161 = vmatprep.subr.bf16.mxu0 0
  %162 = vmatpush1.bf16.msra.mxu0 0
  %163 = vmatprep.subr.bf16.mxu0 0
  %164 = vmatpush1.bf16.msra.mxu0 0
  %165 = vmatprep.subr.bf16.mxu0 0
  %166 = vmatpush1.bf16.msra.mxu0 0
  %167 = vmatprep.subr.bf16.mxu0 0
  %168 = vmatpush1.bf16.msra.mxu0 0
  %169 = vmatprep.subr.bf16.mxu0 0
  %170 = vmatpush1.bf16.msra.mxu0 0
  %171 = vmatprep.subr.bf16.mxu0 0
  %172 = vmatpush1.bf16.msra.mxu0 0
  %173 = vmatprep.subr.bf16.mxu0 0
  %174 = vmatpush1.bf16.msra.mxu0 0
  %175 = vmatprep.subr.bf16.mxu0 0
  %176 = vmatpush1.bf16.msra.mxu0 0
  %177 = vmatprep.mubr.bf16.mxu0 0
  %178 = vmatmul.mubr.bf16.gmra.mrb[0].mxu0 %v87
  %v179 = vpop.f32.mrb[0].mxu0
  %v180 = vadd.f32 0.0, %v179
  %v181 = vpop.f32.mrb[0].mxu0
  %v182 = vadd.f32 0.0, %v181
  %v183 = vpop.f32.mrb[0].mxu0
  %v184 = vadd.f32 0.0, %v183
  %v185 = vpop.f32.mrb[0].mxu0
  %v186 = vadd.f32 0.0, %v185
  %187 = vdwg.mxu0
  %v188 = vadd.f32 %v137, %v139
  %v189 = vadd.f32 %v188, %v180
  %v190 = vadd.f32 %v189, %v182
  %191 = vadd.xlane.f32.xlu0 %v190
  %v192 = vpop.xlane.xlu0 %191
  %v193 = vadd.f32 %v141, %v143
  %v194 = vadd.f32 %v193, %v184
  %v195 = vadd.f32 %v194, %v186
  %196 = vadd.xlane.f32.xlu0 %v195
  %v197 = vpop.xlane.xlu0 %196
  %v198 = vrcp.pop 512.0
  %v199 = vmul.f32 %v192, %v198
  %v200 = vmul.f32 %v197, %v198
  %v201 = vsub.f32 %v137, %v199
  %v202 = vsub.f32 %v139, %v199
  %v203 = vsub.f32 %v180, %v199
  %v204 = vsub.f32 %v182, %v199
  %v205 = vsub.f32 %v141, %v200
  %v206 = vsub.f32 %v143, %v200
  %v207 = vsub.f32 %v184, %v200
  %v208 = vsub.f32 %v186, %v200
  %v209 = vmul.f32 %v201, %v201
  %v210 = vmul.f32 %v202, %v202
  %v211 = vmul.f32 %v203, %v203
  %v212 = vmul.f32 %v204, %v204
  %v213 = vmul.f32 %v205, %v205
  %v214 = vmul.f32 %v206, %v206
  %v215 = vmul.f32 %v207, %v207
  %v216 = vmul.f32 %v208, %v208
  %v217 = vadd.f32 %v209, %v210
  %v218 = vadd.f32 %v217, %v211
  %v219 = vadd.f32 %v218, %v212
  %220 = vadd.xlane.f32.xlu0 %v219
  %v221 = vpop.xlane.xlu0 %220
  %v222 = vadd.f32 %v213, %v214
  %v223 = vadd.f32 %v222, %v215
  %v224 = vadd.f32 %v223, %v216
  %225 = vadd.xlane.f32.xlu0 %v224
  %v226 = vpop.xlane.xlu0 %225
  %v227 = vmul.f32 %v221, %v198
  %v228 = vmul.f32 %v226, %v198
  %v229 = vld [vmem:[%s2] sm:$0xff]
  %v230 = vld [vmem:[%s2 + $0x8] sm:$0xff]
  %v231 = vadd.f32 %v227, 1e-05
  %v232 = vadd.f32 %v228, 1e-05
  %v233 = vrsqrt.pop %v231
  %v234 = vrsqrt.pop %v232
  %v235 = vmul.f32 %v229, %v233
  %v236 = vmul.f32 %v230, %v234
  %238 = vset.pattern.permute.xlu0 0
  %239 = vperm.xlu0 %238, %v235
  %v240 = vpop.permute.xlu0 %239
  %243 = vset.pattern.permute.xlu0 0
  %244 = vperm.xlu0 %243, %v236
  %v245 = vpop.permute.xlu0 %244
  %v247 = vmul.f32 %v201, %v240
  %v248 = vmul.f32 %v202, %v240
  %v249 = vmul.f32 %v203, %v240
  %v250 = vmul.f32 %v204, %v240
  %v251 = vmul.f32 %v205, %v245
  %v252 = vmul.f32 %v206, %v245
  %v253 = vmul.f32 %v207, %v245
  %v254 = vmul.f32 %v208, %v245
  %v255 = vld [vmem:[%s3] sm:$0xff]
  %v256 = vld [vmem:[%s3 + $0x8] sm:$0xff]
  %258 = vset.pattern.permute.xlu0 0
  %259 = vperm.xlu0 %258, %v255
  %v260 = vpop.permute.xlu0 %259
  %263 = vset.pattern.permute.xlu0 0
  %264 = vperm.xlu0 %263, %v256
  %v265 = vpop.permute.xlu0 %264
  %v267 = vadd.f32 %v247, %v260
  %v268 = vadd.f32 %v248, %v260
  %v269 = vadd.f32 %v249, %v260
  %v270 = vadd.f32 %v250, %v260
  %v271 = vadd.f32 %v251, %v265
  %v272 = vadd.f32 %v252, %v265
  %v273 = vadd.f32 %v253, %v265
  %v274 = vadd.f32 %v254, %v265
  %v275 = vmax.f32 %v267, 0.0
  %v276 = vmax.f32 %v268, 0.0
  %v277 = vmax.f32 %v269, 0.0
  %v278 = vmax.f32 %v270, 0.0
  %v279 = vmax.f32 %v271, 0.0
  %v280 = vmax.f32 %v272, 0.0
  %v281 = vmax.f32 %v273, 0.0
  %v282 = vmax.f32 %v274, 0.0
  %283 = vst [vmem:[%s4] sm:$0xff] %v275
  %284 = vst [vmem:[%s4 + $0x8] sm:$0xff] %v276
  %285 = vst [vmem:[%s4 + $0x10] sm:$0xff] %v277
  %286 = vst [vmem:[%s4 + $0x18] sm:$0xff] %v278
  %287 = vst [vmem:[%s4 + $0x20] sm:$0xff] %v279
  %288 = vst [vmem:[%s4 + $0x28] sm:$0xff] %v280
  %289 = vst [vmem:[%s4 + $0x30] sm:$0xff] %v281
  %290 = vst [vmem:[%s4 + $0x38] sm:$0xff] %v282
  // Predicated region
  $region18: #{_lambda_.3} parent=0 // pred_check
    _
  $region19: #{_lambda_.3} parent=0 // pred_check_branch
    %292 = sbr.rel (0) target = $region21
  $region20: #{_lambda_.3} parent=0 // pred_region
    _
  $region21: #{_lambda_.3} parent=0 // pred_fallthru
    _
  // Predicated region
  $region22: #{_lambda_.3} parent=0 // pred_check
    _
  $region23: #{_lambda_.3} parent=0 // pred_check_branch
    %294 = sbr.rel (0) target = $region25
  $region24: #{_lambda_.3} parent=0 // pred_region
    _
  $region25: #{_lambda_.3} parent=0 // pred_fallthru
    _

// kernel: _lambda_.4
$region0: #{_lambda_.4}
  #allocation0 [shape = 'u32[]', space=smem, size = 0x4, offset = 0x4, fixed_abs, tag = 'smem constant byte address 0x4 - core index']
  #allocation1 [shape = 'u32[144,128]{1,0:T(1,128)}', space=vmem, size = 0x12000, scoped, tag = 'internal scratch']
  %s0 = inlined_call_operand.vmem [shape: bf16[144,512], index: 0, kind: input, shape index: {}]
  %s1 = inlined_call_operand.vmem [shape: bf16[16,144], index: 1, kind: input, shape index: {}]
  %s2 = inlined_call_operand.vmem [shape: f32[16,1], index: 2, kind: input, shape index: {}]
  %s3 = inlined_call_operand.vmem [shape: f32[16,1], index: 3, kind: input, shape index: {}]
  %s4 = inlined_call_operand.vmem [shape: f32[16,512], index: 4, kind: output, shape index: {}]
  %s5 = sld [smem:[#allocation0]]
  $region26: #{_lambda_.4} parent=0
    _
  %s7 = ssub.s32 1, %s5
  %s8 = scalar_select 0, %s7, %s5
  // Predicated region
  $region2: #{_lambda_.4} parent=0 // pred_check
    _
  $region3: #{_lambda_.4} parent=0 // pred_check_branch
    %10 = sbr.rel (0) target = $region5
  $region4: #{_lambda_.4} parent=0 // pred_region
    _
  $region5: #{_lambda_.4} parent=0 // pred_fallthru
    _
  // Predicated region
  $region6: #{_lambda_.4} parent=0 // pred_check
    _
  $region7: #{_lambda_.4} parent=0 // pred_check_branch
    %12 = sbr.rel (0) target = $region9
  $region8: #{_lambda_.4} parent=0 // pred_region
    _
  $region9: #{_lambda_.4} parent=0 // pred_fallthru
    _
  // Predicated region
  $region10: #{_lambda_.4} parent=0 // pred_check
    _
  $region11: #{_lambda_.4} parent=0 // pred_check_branch
    %14 = sbr.rel (0) target = $region13
  $region12: #{_lambda_.4} parent=0 // pred_region
    _
  $region13: #{_lambda_.4} parent=0 // pred_fallthru
    _
  // Predicated region
  $region14: #{_lambda_.4} parent=0 // pred_check
    _
  $region15: #{_lambda_.4} parent=0 // pred_check_branch
    %16 = sbr.rel (0) target = $region17
  $region16: #{_lambda_.4} parent=0 // pred_region
    _
  $region17: #{_lambda_.4} parent=0 // pred_fallthru
    _
  %v18 = vld [vmem:[%s1] sm:$0xff]
  %v19 = vld [vmem:[%s1 + $0x8] sm:$0xff]
  %v20 = vld [vmem:[%s0] sm:$0xff]
  %v21 = vld [vmem:[%s0 + $0x8] sm:$0xff]
  %v22 = vld [vmem:[%s0 + $0x10] sm:$0xff]
  %v23 = vld [vmem:[%s0 + $0x18] sm:$0xff]
  %v24 = vld [vmem:[%s0 + $0x20] sm:$0xff]
  %v25 = vld [vmem:[%s0 + $0x28] sm:$0xff]
  %v26 = vld [vmem:[%s0 + $0x30] sm:$0xff]
  %v27 = vld [vmem:[%s0 + $0x38] sm:$0xff]
  %v28 = vld [vmem:[%s0 + $0x40] sm:$0xff]
  %v29 = vld [vmem:[%s0 + $0x48] sm:$0xff]
  %v30 = vld [vmem:[%s0 + $0x50] sm:$0xff]
  %v31 = vld [vmem:[%s0 + $0x58] sm:$0xff]
  %v32 = vld [vmem:[%s0 + $0x60] sm:$0xff]
  %v33 = vld [vmem:[%s0 + $0x68] sm:$0xff]
  %v34 = vld [vmem:[%s0 + $0x70] sm:$0xff]
  %v35 = vld [vmem:[%s0 + $0x78] sm:$0xff]
  %v36 = vld [vmem:[%s0 + $0x80] sm:$0xff]
  %v37 = vld [vmem:[%s0 + $0x88] sm:$0xff]
  %v38 = vld [vmem:[%s0 + $0x90] sm:$0xff]
  %v39 = vld [vmem:[%s0 + $0x98] sm:$0xff]
  %v40 = vld [vmem:[%s0 + $0xa0] sm:$0xff]
  %v41 = vld [vmem:[%s0 + $0xa8] sm:$0xff]
  %v42 = vld [vmem:[%s0 + $0xb0] sm:$0xff]
  %v43 = vld [vmem:[%s0 + $0xb8] sm:$0xff]
  %v44 = vld [vmem:[%s0 + $0xc0] sm:$0xff]
  %v45 = vld [vmem:[%s0 + $0xc8] sm:$0xff]
  %v46 = vld [vmem:[%s0 + $0xd0] sm:$0xff]
  %v47 = vld [vmem:[%s0 + $0xd8] sm:$0xff]
  %v48 = vld [vmem:[%s0 + $0xe0] sm:$0xff]
  %v49 = vld [vmem:[%s0 + $0xe8] sm:$0xff]
  %v50 = vld [vmem:[%s0 + $0xf0] sm:$0xff]
  %v51 = vld [vmem:[%s0 + $0xf8] sm:$0xff]
  %v52 = vld [vmem:[%s0 + $0x100] sm:$0xff]
  %v53 = vld [vmem:[%s0 + $0x108] sm:$0xff]
  %v54 = vld [vmem:[%s0 + $0x110] sm:$0xff]
  %v55 = vld [vmem:[%s0 + $0x118] sm:$0xff]
  %v58 = vunpack.c.l.b16 %v18
  %v59 = vunpack.c.h.b16 %v18
  %v60 = vunpack.c.l.b16 %v19
  %v61 = vunpack.c.h.b16 %v19
  %v62 = vpack.c.b16 %v60, %v58
  %v63 = vpack.c.b16 %v61, %v59
  %v101 = vunpack.c.l.b16 %v20
  %v102 = vunpack.c.h.b16 %v20
  %v103 = vunpack.c.l.b16 %v21
  %v104 = vunpack.c.h.b16 %v21
  %v105 = vunpack.c.l.b16 %v22
  %v106 = vunpack.c.h.b16 %v22
  %v107 = vunpack.c.l.b16 %v23
  %v108 = vunpack.c.h.b16 %v23
  %v109 = vunpack.c.l.b16 %v24
  %v110 = vunpack.c.h.b16 %v24
  %v111 = vunpack.c.l.b16 %v25
  %v112 = vunpack.c.h.b16 %v25
  %v113 = vunpack.c.l.b16 %v26
  %v114 = vunpack.c.h.b16 %v26
  %v115 = vunpack.c.l.b16 %v27
  %v116 = vunpack.c.h.b16 %v27
  %v117 = vunpack.c.l.b16 %v28
  %v118 = vunpack.c.h.b16 %v28
  %v119 = vunpack.c.l.b16 %v29
  %v120 = vunpack.c.h.b16 %v29
  %v121 = vunpack.c.l.b16 %v30
  %v122 = vunpack.c.h.b16 %v30
  %v123 = vunpack.c.l.b16 %v31
  %v124 = vunpack.c.h.b16 %v31
  %v125 = vunpack.c.l.b16 %v32
  %v126 = vunpack.c.h.b16 %v32
  %v127 = vunpack.c.l.b16 %v33
  %v128 = vunpack.c.h.b16 %v33
  %v129 = vunpack.c.l.b16 %v34
  %v130 = vunpack.c.h.b16 %v34
  %v131 = vunpack.c.l.b16 %v35
  %v132 = vunpack.c.h.b16 %v35
  %v133 = vunpack.c.l.b16 %v36
  %v134 = vunpack.c.h.b16 %v36
  %v135 = vunpack.c.l.b16 %v37
  %v136 = vunpack.c.h.b16 %v37
  %v137 = vunpack.c.l.b16 %v38
  %v138 = vunpack.c.h.b16 %v38
  %v139 = vunpack.c.l.b16 %v39
  %v140 = vunpack.c.h.b16 %v39
  %v141 = vunpack.c.l.b16 %v40
  %v142 = vunpack.c.h.b16 %v40
  %v143 = vunpack.c.l.b16 %v41
  %v144 = vunpack.c.h.b16 %v41
  %v145 = vunpack.c.l.b16 %v42
  %v146 = vunpack.c.h.b16 %v42
  %v147 = vunpack.c.l.b16 %v43
  %v148 = vunpack.c.h.b16 %v43
  %v149 = vunpack.c.l.b16 %v44
  %v150 = vunpack.c.h.b16 %v44
  %v151 = vunpack.c.l.b16 %v45
  %v152 = vunpack.c.h.b16 %v45
  %v153 = vunpack.c.l.b16 %v46
  %v154 = vunpack.c.h.b16 %v46
  %v155 = vunpack.c.l.b16 %v47
  %v156 = vunpack.c.h.b16 %v47
  %v157 = vunpack.c.l.b16 %v48
  %v158 = vunpack.c.h.b16 %v48
  %v159 = vunpack.c.l.b16 %v49
  %v160 = vunpack.c.h.b16 %v49
  %v161 = vunpack.c.l.b16 %v50
  %v162 = vunpack.c.h.b16 %v50
  %v163 = vunpack.c.l.b16 %v51
  %v164 = vunpack.c.h.b16 %v51
  %v165 = vunpack.c.l.b16 %v52
  %v166 = vunpack.c.h.b16 %v52
  %v167 = vunpack.c.l.b16 %v53
  %v168 = vunpack.c.h.b16 %v53
  %v169 = vunpack.c.l.b16 %v54
  %v170 = vunpack.c.h.b16 %v54
  %v171 = vunpack.c.l.b16 %v55
  %v172 = vunpack.c.h.b16 %v55
  %v173 = vpack.c.b16 %v105, %v101
  %v174 = vpack.c.b16 %v106, %v102
  %v175 = vpack.c.b16 %v107, %v103
  %v176 = vpack.c.b16 %v108, %v104
  %v177 = vpack.c.b16 %v113, %v109
  %v178 = vpack.c.b16 %v114, %v110
  %v179 = vpack.c.b16 %v115, %v111
  %v180 = vpack.c.b16 %v116, %v112
  %v181 = vpack.c.b16 %v121, %v117
  %v182 = vpack.c.b16 %v122, %v118
  %v183 = vpack.c.b16 %v123, %v119
  %v184 = vpack.c.b16 %v124, %v120
  %v185 = vpack.c.b16 %v129, %v125
  %v186 = vpack.c.b16 %v130, %v126
  %v187 = vpack.c.b16 %v131, %v127
  %v188 = vpack.c.b16 %v132, %v128
  %v189 = vpack.c.b16 %v137, %v133
  %v190 = vpack.c.b16 %v138, %v134
  %v191 = vpack.c.b16 %v139, %v135
  %v192 = vpack.c.b16 %v140, %v136
  %v193 = vpack.c.b16 %v145, %v141
  %v194 = vpack.c.b16 %v146, %v142
  %v195 = vpack.c.b16 %v147, %v143
  %v196 = vpack.c.b16 %v148, %v144
  %v197 = vpack.c.b16 %v153, %v149
  %v198 = vpack.c.b16 %v154, %v150
  %v199 = vpack.c.b16 %v155, %v151
  %v200 = vpack.c.b16 %v156, %v152
  %v201 = vpack.c.b16 %v161, %v157
  %v202 = vpack.c.b16 %v162, %v158
  %v203 = vpack.c.b16 %v163, %v159
  %v204 = vpack.c.b16 %v164, %v160
  %v205 = vpack.c.b16 %v169, %v165
  %v206 = vpack.c.b16 %v170, %v166
  %v207 = vpack.c.b16 %v171, %v167
  %v208 = vpack.c.b16 %v172, %v168
  %vm245 = vcmask 130048
  %v247 = vsel %vm245, %v63, 0
  %249 = vmatprep.subr.bf16.mxu0 %v174
  %250 = vmatpush1.bf16.msra.mxu0 %v173
  %251 = vmatprep.subr.bf16.mxu0 %v178
  %252 = vmatpush1.bf16.msra.mxu0 %v177
  %253 = vmatprep.subr.bf16.mxu0 %v182
  %254 = vmatpush1.bf16.msra.mxu0 %v181
  %255 = vmatprep.subr.bf16.mxu0 %v186
  %256 = vmatpush1.bf16.msra.mxu0 %v185
  %257 = vmatprep.subr.bf16.mxu0 %v190
  %258 = vmatpush1.bf16.msra.mxu0 %v189
  %259 = vmatprep.subr.bf16.mxu0 %v194
  %260 = vmatpush1.bf16.msra.mxu0 %v193
  %261 = vmatprep.subr.bf16.mxu0 %v198
  %262 = vmatpush1.bf16.msra.mxu0 %v197
  %263 = vmatprep.subr.bf16.mxu0 %v202
  %264 = vmatpush1.bf16.msra.mxu0 %v201
  %265 = vmatprep.subr.bf16.mxu0 %v206
  %266 = vmatpush1.bf16.msra.mxu0 %v205
  %267 = vmatprep.subr.bf16.mxu0 0
  %268 = vmatpush1.bf16.msra.mxu0 0
  %269 = vmatprep.subr.bf16.mxu0 0
  %270 = vmatpush1.bf16.msra.mxu0 0
  %271 = vmatprep.subr.bf16.mxu0 0
  %272 = vmatpush1.bf16.msra.mxu0 0
  %273 = vmatprep.subr.bf16.mxu0 0
  %274 = vmatpush1.bf16.msra.mxu0 0
  %275 = vmatprep.subr.bf16.mxu0 0
  %276 = vmatpush1.bf16.msra.mxu0 0
  %277 = vmatprep.subr.bf16.mxu0 0
  %278 = vmatpush1.bf16.msra.mxu0 0
  %279 = vmatprep.subr.bf16.mxu0 0
  %280 = vmatpush1.bf16.msra.mxu0 0
  %281 = vmatprep.mubr.bf16.mxu0 %v247
  %282 = vmatmul.mubr.bf16.gmra.mrb[0].mxu0 %v62
  %v283 = vpop.f32.mrb[0].mxu0
  %v284 = vadd.f32 0.0, %v283
  %v285 = vpop.f32.mrb[0].mxu0
  %v286 = vadd.f32 0.0, %v285
  %v287 = vpop.f32.mrb[0].mxu0
  %v288 = vadd.f32 0.0, %v287
  %v289 = vpop.f32.mrb[0].mxu0
  %v290 = vadd.f32 0.0, %v289
  %291 = vdwg.mxu0
  %292 = vmatprep.subr.bf16.mxu0 %v176
  %293 = vmatpush1.bf16.msra.mxu0 %v175
  %294 = vmatprep.subr.bf16.mxu0 %v180
  %295 = vmatpush1.bf16.msra.mxu0 %v179
  %296 = vmatprep.subr.bf16.mxu0 %v184
  %297 = vmatpush1.bf16.msra.mxu0 %v183
  %298 = vmatprep.subr.bf16.mxu0 %v188
  %299 = vmatpush1.bf16.msra.mxu0 %v187
  %300 = vmatprep.subr.bf16.mxu0 %v192
  %301 = vmatpush1.bf16.msra.mxu0 %v191
  %302 = vmatprep.subr.bf16.mxu0 %v196
  %303 = vmatpush1.bf16.msra.mxu0 %v195
  %304 = vmatprep.subr.bf16.mxu0 %v200
  %305 = vmatpush1.bf16.msra.mxu0 %v199
  %306 = vmatprep.subr.bf16.mxu0 %v204
  %307 = vmatpush1.bf16.msra.mxu0 %v203
  %308 = vmatprep.subr.bf16.mxu0 %v208
  %309 = vmatpush1.bf16.msra.mxu0 %v207
  %310 = vmatprep.subr.bf16.mxu0 0
  %311 = vmatpush1.bf16.msra.mxu0 0
  %312 = vmatprep.subr.bf16.mxu0 0
  %313 = vmatpush1.bf16.msra.mxu0 0
  %314 = vmatprep.subr.bf16.mxu0 0
  %315 = vmatpush1.bf16.msra.mxu0 0
  %316 = vmatprep.subr.bf16.mxu0 0
  %317 = vmatpush1.bf16.msra.mxu0 0
  %318 = vmatprep.subr.bf16.mxu0 0
  %319 = vmatpush1.bf16.msra.mxu0 0
  %320 = vmatprep.subr.bf16.mxu0 0
  %321 = vmatpush1.bf16.msra.mxu0 0
  %322 = vmatprep.subr.bf16.mxu0 0
  %323 = vmatpush1.bf16.msra.mxu0 0
  %324 = vmatprep.mubr.bf16.mxu0 %v247
  %325 = vmatmul.mubr.bf16.gmra.mrb[0].mxu0 %v62
  %v326 = vpop.f32.mrb[0].mxu0
  %v327 = vadd.f32 0.0, %v326
  %v328 = vpop.f32.mrb[0].mxu0
  %v329 = vadd.f32 0.0, %v328
  %v330 = vpop.f32.mrb[0].mxu0
  %v331 = vadd.f32 0.0, %v330
  %v332 = vpop.f32.mrb[0].mxu0
  %v333 = vadd.f32 0.0, %v332
  %334 = vdwg.mxu0
  %v335 = vadd.f32 %v284, %v286
  %v336 = vadd.f32 %v335, %v327
  %v337 = vadd.f32 %v336, %v329
  %338 = vadd.xlane.f32.xlu0 %v337
  %v339 = vpop.xlane.xlu0 %338
  %v340 = vadd.f32 %v288, %v290
  %v341 = vadd.f32 %v340, %v331
  %v342 = vadd.f32 %v341, %v333
  %343 = vadd.xlane.f32.xlu0 %v342
  %v344 = vpop.xlane.xlu0 %343
  %v345 = vrcp.pop 512.0
  %v346 = vmul.f32 %v339, %v345
  %v347 = vmul.f32 %v344, %v345
  %v348 = vsub.f32 %v284, %v346
  %v349 = vsub.f32 %v286, %v346
  %v350 = vsub.f32 %v327, %v346
  %v351 = vsub.f32 %v329, %v346
  %v352 = vsub.f32 %v288, %v347
  %v353 = vsub.f32 %v290, %v347
  %v354 = vsub.f32 %v331, %v347
  %v355 = vsub.f32 %v333, %v347
  %v356 = vmul.f32 %v348, %v348
  %v357 = vmul.f32 %v349, %v349
  %v358 = vmul.f32 %v350, %v350
  %v359 = vmul.f32 %v351, %v351
  %v360 = vmul.f32 %v352, %v352
  %v361 = vmul.f32 %v353, %v353
  %v362 = vmul.f32 %v354, %v354
  %v363 = vmul.f32 %v355, %v355
  %v364 = vadd.f32 %v356, %v357
  %v365 = vadd.f32 %v364, %v358
  %v366 = vadd.f32 %v365, %v359
  %367 = vadd.xlane.f32.xlu0 %v366
  %v368 = vpop.xlane.xlu0 %367
  %v369 = vadd.f32 %v360, %v361
  %v370 = vadd.f32 %v369, %v362
  %v371 = vadd.f32 %v370, %v363
  %372 = vadd.xlane.f32.xlu0 %v371
  %v373 = vpop.xlane.xlu0 %372
  %v374 = vmul.f32 %v368, %v345
  %v375 = vmul.f32 %v373, %v345
  %v376 = vld [vmem:[%s2] sm:$0xff]
  %v377 = vld [vmem:[%s2 + $0x8] sm:$0xff]
  %v378 = vadd.f32 %v374, 1e-05
  %v379 = vadd.f32 %v375, 1e-05
  %v380 = vrsqrt.pop %v378
  %v381 = vrsqrt.pop %v379
  %v382 = vmul.f32 %v376, %v380
  %v383 = vmul.f32 %v377, %v381
  %385 = vset.pattern.permute.xlu0 0
  %386 = vperm.xlu0 %385, %v382
  %v387 = vpop.permute.xlu0 %386
  %390 = vset.pattern.permute.xlu0 0
  %391 = vperm.xlu0 %390, %v383
  %v392 = vpop.permute.xlu0 %391
  %v394 = vmul.f32 %v348, %v387
  %v395 = vmul.f32 %v349, %v387
  %v396 = vmul.f32 %v350, %v387
  %v397 = vmul.f32 %v351, %v387
  %v398 = vmul.f32 %v352, %v392
  %v399 = vmul.f32 %v353, %v392
  %v400 = vmul.f32 %v354, %v392
  %v401 = vmul.f32 %v355, %v392
  %v402 = vld [vmem:[%s3] sm:$0xff]
  %v403 = vld [vmem:[%s3 + $0x8] sm:$0xff]
  %405 = vset.pattern.permute.xlu0 0
  %406 = vperm.xlu0 %405, %v402
  %v407 = vpop.permute.xlu0 %406
  %410 = vset.pattern.permute.xlu0 0
  %411 = vperm.xlu0 %410, %v403
  %v412 = vpop.permute.xlu0 %411
  %v414 = vadd.f32 %v394, %v407
  %v415 = vadd.f32 %v395, %v407
  %v416 = vadd.f32 %v396, %v407
  %v417 = vadd.f32 %v397, %v407
  %v418 = vadd.f32 %v398, %v412
  %v419 = vadd.f32 %v399, %v412
  %v420 = vadd.f32 %v400, %v412
  %v421 = vadd.f32 %v401, %v412
  %v422 = vmax.f32 %v414, 0.0
  %v423 = vmax.f32 %v415, 0.0
  %v424 = vmax.f32 %v416, 0.0
  %v425 = vmax.f32 %v417, 0.0
  %v426 = vmax.f32 %v418, 0.0
  %v427 = vmax.f32 %v419, 0.0
  %v428 = vmax.f32 %v420, 0.0
  %v429 = vmax.f32 %v421, 0.0
  %430 = vst [vmem:[%s4] sm:$0xff] %v422
  %431 = vst [vmem:[%s4 + $0x8] sm:$0xff] %v423
  %432 = vst [vmem:[%s4 + $0x10] sm:$0xff] %v424
  %433 = vst [vmem:[%s4 + $0x18] sm:$0xff] %v425
  %434 = vst [vmem:[%s4 + $0x20] sm:$0xff] %v426
  %435 = vst [vmem:[%s4 + $0x28] sm:$0xff] %v427
  %436 = vst [vmem:[%s4 + $0x30] sm:$0xff] %v428
  %437 = vst [vmem:[%s4 + $0x38] sm:$0xff] %v429
  // Predicated region
  $region18: #{_lambda_.4} parent=0 // pred_check
    _
  $region19: #{_lambda_.4} parent=0 // pred_check_branch
    %439 = sbr.rel (0) target = $region21
  $region20: #{_lambda_.4} parent=0 // pred_region
    _
  $region21: #{_lambda_.4} parent=0 // pred_fallthru
    _
  // Predicated region
  $region22: #{_lambda_.4} parent=0 // pred_check
    _
  $region23: #{_lambda_.4} parent=0 // pred_check_branch
    %441 = sbr.rel (0) target = $region25
  $region24: #{_lambda_.4} parent=0 // pred_region
    _
  $region25: #{_lambda_.4} parent=0 // pred_fallthru
    _

// kernel: _lambda_.5
$region0: #{_lambda_.5}
  #allocation0 [shape = 'u32[]', space=smem, size = 0x4, offset = 0x4, fixed_abs, tag = 'smem constant byte address 0x4 - core index']
  #allocation1 [shape = 'u32[144,128]{1,0:T(1,128)}', space=vmem, size = 0x12000, scoped, tag = 'internal scratch']
  %s0 = inlined_call_operand.vmem [shape: bf16[144,128], index: 0, kind: input, shape index: {}]
  %s1 = inlined_call_operand.vmem [shape: bf16[16,144], index: 1, kind: input, shape index: {}]
  %s2 = inlined_call_operand.vmem [shape: f32[16,1], index: 2, kind: input, shape index: {}]
  %s3 = inlined_call_operand.vmem [shape: f32[16,1], index: 3, kind: input, shape index: {}]
  %s4 = inlined_call_operand.vmem [shape: f32[16,128], index: 4, kind: output, shape index: {}]
  %s5 = sld [smem:[#allocation0]]
  $region26: #{_lambda_.5} parent=0
    _
  %s7 = ssub.s32 1, %s5
  %s8 = scalar_select 0, %s7, %s5
  // Predicated region
  $region2: #{_lambda_.5} parent=0 // pred_check
    _
  $region3: #{_lambda_.5} parent=0 // pred_check_branch
    %10 = sbr.rel (0) target = $region5
  $region4: #{_lambda_.5} parent=0 // pred_region
    _
  $region5: #{_lambda_.5} parent=0 // pred_fallthru
    _
  // Predicated region
  $region6: #{_lambda_.5} parent=0 // pred_check
    _
  $region7: #{_lambda_.5} parent=0 // pred_check_branch
    %12 = sbr.rel (0) target = $region9
  $region8: #{_lambda_.5} parent=0 // pred_region
    _
  $region9: #{_lambda_.5} parent=0 // pred_fallthru
    _
  // Predicated region
  $region10: #{_lambda_.5} parent=0 // pred_check
    _
  $region11: #{_lambda_.5} parent=0 // pred_check_branch
    %14 = sbr.rel (0) target = $region13
  $region12: #{_lambda_.5} parent=0 // pred_region
    _
  $region13: #{_lambda_.5} parent=0 // pred_fallthru
    _
  // Predicated region
  $region14: #{_lambda_.5} parent=0 // pred_check
    _
  $region15: #{_lambda_.5} parent=0 // pred_check_branch
    %16 = sbr.rel (0) target = $region17
  $region16: #{_lambda_.5} parent=0 // pred_region
    _
  $region17: #{_lambda_.5} parent=0 // pred_fallthru
    _
  %v18 = vld [vmem:[%s1] sm:$0xff]
  %v19 = vld [vmem:[%s1 + $0x8] sm:$0xff]
  %v20 = vld [vmem:[%s0] sm:$0xf]
  %v21 = vld [vmem:[%s0 + $0x4] sm:$0xf]
  %v22 = vld [vmem:[%s0 + $0x8] sm:$0xf]
  %v23 = vld [vmem:[%s0 + $0xc] sm:$0xf]
  %v24 = vld [vmem:[%s0 + $0x10] sm:$0xf]
  %v25 = vld [vmem:[%s0 + $0x14] sm:$0xf]
  %v26 = vld [vmem:[%s0 + $0x18] sm:$0xf]
  %v27 = vld [vmem:[%s0 + $0x1c] sm:$0xf]
  %v28 = vld [vmem:[%s0 + $0x20] sm:$0xf]
  %v29 = vld [vmem:[%s0 + $0x24] sm:$0xf]
  %v30 = vld [vmem:[%s0 + $0x28] sm:$0xf]
  %v31 = vld [vmem:[%s0 + $0x2c] sm:$0xf]
  %v32 = vld [vmem:[%s0 + $0x30] sm:$0xf]
  %v33 = vld [vmem:[%s0 + $0x34] sm:$0xf]
  %v34 = vld [vmem:[%s0 + $0x38] sm:$0xf]
  %v35 = vld [vmem:[%s0 + $0x3c] sm:$0xf]
  %v36 = vld [vmem:[%s0 + $0x40] sm:$0xf]
  %v37 = vld [vmem:[%s0 + $0x44] sm:$0xf]
  %v40 = vunpack.c.l.b16 %v18
  %v41 = vunpack.c.h.b16 %v18
  %v42 = vunpack.c.l.b16 %v19
  %v43 = vunpack.c.h.b16 %v19
  %v44 = vpack.c.b16 %v42, %v40
  %v45 = vpack.c.b16 %v43, %v41
  %v65 = vunpack.c.l.b16 %v20
  %v66 = vunpack.c.l.b16 %v21
  %v67 = vunpack.c.l.b16 %v22
  %v68 = vunpack.c.l.b16 %v23
  %v69 = vunpack.c.l.b16 %v24
  %v70 = vunpack.c.l.b16 %v25
  %v71 = vunpack.c.l.b16 %v26
  %v72 = vunpack.c.l.b16 %v27
  %v73 = vunpack.c.l.b16 %v28
  %v74 = vunpack.c.l.b16 %v29
  %v75 = vunpack.c.l.b16 %v30
  %v76 = vunpack.c.l.b16 %v31
  %v77 = vunpack.c.l.b16 %v32
  %v78 = vunpack.c.l.b16 %v33
  %v79 = vunpack.c.l.b16 %v34
  %v80 = vunpack.c.l.b16 %v35
  %v81 = vunpack.c.l.b16 %v36
  %v82 = vunpack.c.l.b16 %v37
  %v83 = vpack.c.b16 %v66, %v65
  %v84 = vpack.c.b16 %v68, %v67
  %v85 = vpack.c.b16 %v70, %v69
  %v86 = vpack.c.b16 %v72, %v71
  %v87 = vpack.c.b16 %v74, %v73
  %v88 = vpack.c.b16 %v76, %v75
  %v89 = vpack.c.b16 %v78, %v77
  %v90 = vpack.c.b16 %v80, %v79
  %v91 = vpack.c.b16 %v82, %v81
  %vm101 = vcmask 130048
  %v103 = vsel %vm101, %v45, 0
  %105 = vmatprep.subr.bf16.mxu0 0
  %106 = vmatpush1.bf16.msra.mxu0 %v83
  %107 = vmatprep.subr.bf16.mxu0 0
  %108 = vmatpush1.bf16.msra.mxu0 %v84
  %109 = vmatprep.subr.bf16.mxu0 0
  %110 = vmatpush1.bf16.msra.mxu0 %v85
  %111 = vmatprep.subr.bf16.mxu0 0
  %112 = vmatpush1.bf16.msra.mxu0 %v86
  %113 = vmatprep.subr.bf16.mxu0 0
  %114 = vmatpush1.bf16.msra.mxu0 %v87
  %115 = vmatprep.subr.bf16.mxu0 0
  %116 = vmatpush1.bf16.msra.mxu0 %v88
  %117 = vmatprep.subr.bf16.mxu0 0
  %118 = vmatpush1.bf16.msra.mxu0 %v89
  %119 = vmatprep.subr.bf16.mxu0 0
  %120 = vmatpush1.bf16.msra.mxu0 %v90
  %121 = vmatprep.subr.bf16.mxu0 0
  %122 = vmatpush1.bf16.msra.mxu0 %v91
  %123 = vmatprep.subr.bf16.mxu0 0
  %124 = vmatpush1.bf16.msra.mxu0 0
  %125 = vmatprep.subr.bf16.mxu0 0
  %126 = vmatpush1.bf16.msra.mxu0 0
  %127 = vmatprep.subr.bf16.mxu0 0
  %128 = vmatpush1.bf16.msra.mxu0 0
  %129 = vmatprep.subr.bf16.mxu0 0
  %130 = vmatpush1.bf16.msra.mxu0 0
  %131 = vmatprep.subr.bf16.mxu0 0
  %132 = vmatpush1.bf16.msra.mxu0 0
  %133 = vmatprep.subr.bf16.mxu0 0
  %134 = vmatpush1.bf16.msra.mxu0 0
  %135 = vmatprep.subr.bf16.mxu0 0
  %136 = vmatpush1.bf16.msra.mxu0 0
  %137 = vmatprep.mubr.bf16.mxu0 %v103
  %138 = vmatmul.mubr.bf16.gmra.mrb[0].mxu0 %v44
  %v139 = vpop.f32.mrb[0].mxu0
  %v140 = vadd.f32 0.0, %v139
  %v141 = vpop.f32.mrb[0].mxu0
  %v142 = vpop.f32.mrb[0].mxu0
  %v143 = vadd.f32 0.0, %v142
  %v144 = vpop.f32.mrb[0].mxu0
  %145 = vdwg.mxu0
  %146 = vadd.xlane.f32.xlu0 %v140
  %v147 = vpop.xlane.xlu0 %146
  %148 = vadd.xlane.f32.xlu0 %v143
  %v149 = vpop.xlane.xlu0 %148
  %v150 = vrcp.pop 128.0
  %v151 = vmul.f32 %v147, %v150
  %v152 = vmul.f32 %v149, %v150
  %v153 = vsub.f32 %v140, %v151
  %v154 = vsub.f32 %v143, %v152
  %v155 = vmul.f32 %v153, %v153
  %v156 = vmul.f32 %v154, %v154
  %157 = vadd.xlane.f32.xlu0 %v155
  %v158 = vpop.xlane.xlu0 %157
  %159 = vadd.xlane.f32.xlu0 %v156
  %v160 = vpop.xlane.xlu0 %159
  %v161 = vmul.f32 %v158, %v150
  %v162 = vmul.f32 %v160, %v150
  %v163 = vld [vmem:[%s2] sm:$0xff]
  %v164 = vld [vmem:[%s2 + $0x8] sm:$0xff]
  %v165 = vadd.f32 %v161, 1e-05
  %v166 = vadd.f32 %v162, 1e-05
  %v167 = vrsqrt.pop %v165
  %v168 = vrsqrt.pop %v166
  %v169 = vmul.f32 %v163, %v167
  %v170 = vmul.f32 %v164, %v168
  %172 = vset.pattern.permute.xlu0 0
  %173 = vperm.xlu0 %172, %v169
  %v174 = vpop.permute.xlu0 %173
  %177 = vset.pattern.permute.xlu0 0
  %178 = vperm.xlu0 %177, %v170
  %v179 = vpop.permute.xlu0 %178
  %v181 = vmul.f32 %v153, %v174
  %v182 = vmul.f32 %v154, %v179
  %v183 = vld [vmem:[%s3] sm:$0xff]
  %v184 = vld [vmem:[%s3 + $0x8] sm:$0xff]
  %186 = vset.pattern.permute.xlu0 0
  %187 = vperm.xlu0 %186, %v183
  %v188 = vpop.permute.xlu0 %187
  %191 = vset.pattern.permute.xlu0 0
  %192 = vperm.xlu0 %191, %v184
  %v193 = vpop.permute.xlu0 %192
  %v195 = vadd.f32 %v181, %v188
  %v196 = vadd.f32 %v182, %v193
  %v197 = vmax.f32 %v195, 0.0
  %v198 = vmax.f32 %v196, 0.0
  %199 = vst [vmem:[%s4] sm:$0xff] %v197
  %200 = vst [vmem:[%s4 + $0x8] sm:$0xff] %v198
  // Predicated region
  $region18: #{_lambda_.5} parent=0 // pred_check
    _
  $region19: #{_lambda_.5} parent=0 // pred_check_branch
    %202 = sbr.rel (0) target = $region21
  $region20: #{_lambda_.5} parent=0 // pred_region
    _
  $region21: #{_lambda_.5} parent=0 // pred_fallthru
    _
  // Predicated region
  $region22: #{_lambda_.5} parent=0 // pred_check
    _
  $region23: #{_lambda_.5} parent=0 // pred_check_branch
    %204 = sbr.rel (0) target = $region25
  $region24: #{_lambda_.5} parent=0 // pred_region
    _
  $region25: #{_lambda_.5} parent=0 // pred_fallthru
    _

</llo_original>
